<compile_context>
chip_gen: v5e
topology: v5e:2x2
jax: 0.10.0
libtpu: 0.0.40
codegen_flags: <defaults>
</compile_context>

<pallas_src>
import jax
import jax.numpy as jnp
from jax.experimental import pallas as pl
from jax.experimental.pallas import tpu as pltpu

LANE = 128


def _round_up(x, m):
    return ((x + m - 1) // m) * m


def bcf_mlp_kernel(x_ref, w0_ref, b0_ref, w1_ref, b1_ref, w2_ref, b2_ref, o_ref):
    # in_layer + ReLU   (dropout == identity in eval)
    y = jnp.dot(x_ref[...], w0_ref[...], preferred_element_type=jnp.float32)
    y = jnp.maximum(y + b0_ref[...], 0.0)
    # hidden layer + ReLU (Dropout identity in eval; padded lanes stay exactly 0)
    y = jnp.dot(y.astype(jnp.bfloat16), w1_ref[...], preferred_element_type=jnp.float32)
    y = jnp.maximum(y + b1_ref[...], 0.0)
    # out_layer + sigmoid, stored lane-dense into the 128-wide padded output block
    z = jnp.dot(y.astype(jnp.bfloat16), w2_ref[...], preferred_element_type=jnp.float32)
    o_ref[...] = jax.nn.sigmoid(z + b2_ref[...])


def pad_params(params):
    """Zero-pad every weight's output dim up to a multiple of 128 lanes and cast
    the matmul operands (weights) to bf16.  Biases stay f32 (elementwise path)."""
    padded = []
    prev_pad = None
    for (w, b) in params:
        fin, fout = w.shape
        fin_pad = fin if prev_pad is None else prev_pad
        fout_pad = _round_up(fout, LANE)
        wp = jnp.zeros((fin_pad, fout_pad), jnp.bfloat16)
        wp = wp.at[:fin, :fout].set(w.astype(jnp.bfloat16))
        bp = jnp.zeros((1, fout_pad), jnp.float32).at[:, :fout].set(b)
        padded.append((wp, bp))
        prev_pad = fout_pad
    return padded


def bcf_forward(x, params, *, batch_tile=512):
    """x: (B, in_in) f32; params: three (w, b) f32 pairs (unpadded, [in, out] layout)."""
    B, in_in = x.shape
    out_dim = params[-1][0].shape[1]

    (w0, b0), (w1, b1), (w2, b2) = pad_params(params)
    out_pad = w2.shape[1]

    # Pick the batch tile: as large as requested, but shrink (by powers of two,
    # never below 16 rows = one bf16 sublane tile) for small batches so the grid
    # still has >= 2 steps and both v7x TensorCores get work.
    bt = batch_tile
    while bt > 16 and _round_up(B, bt) // bt < 2:
        bt //= 2
    B_pad = _round_up(B, bt)
    grid = (B_pad // bt,)

    # Zero-pad the batch and stream the activation in bf16 (halves HBM read bytes).
    x_p = jnp.zeros((B_pad, in_in), jnp.bfloat16).at[:B].set(x.astype(jnp.bfloat16))

    def x_map(i):
        return (i, 0)

    def const_map(i):
        return (0, 0)

    flops = 2 * B_pad * (in_in * w0.shape[1]
                         + w1.shape[0] * w1.shape[1]
                         + w2.shape[0] * w2.shape[1])
    bytes_accessed = (x_p.size * x_p.dtype.itemsize
                      + sum(int(a.size) * a.dtype.itemsize
                            for a in (w0, b0, w1, b1, w2, b2))
                      + B_pad * out_pad * 4)
    cost = pl.CostEstimate(flops=int(flops),
                           transcendentals=int(B_pad * out_pad),
                           bytes_accessed=int(bytes_accessed))

    out_padded = pl.pallas_call(
        bcf_mlp_kernel,
        out_shape=jax.ShapeDtypeStruct((B_pad, out_pad), jnp.float32),
        grid_spec=pltpu.PrefetchScalarGridSpec(
            num_scalar_prefetch=0,
            grid=grid,
            in_specs=[
                pl.BlockSpec((bt, in_in), x_map),
                pl.BlockSpec(w0.shape, const_map),
                pl.BlockSpec(b0.shape, const_map),
                pl.BlockSpec(w1.shape, const_map),
                pl.BlockSpec(b1.shape, const_map),
                pl.BlockSpec(w2.shape, const_map),
                pl.BlockSpec(b2.shape, const_map),
            ],
            out_specs=pl.BlockSpec((bt, out_pad), x_map),
        ),
        compiler_params=pltpu.CompilerParams(
            dimension_semantics=("parallel",)),
        cost_estimate=cost,
    )(x_p, w0, b0, w1, b1, w2, b2)

    # Strip the batch and lane padding (padded output lanes hold sigmoid(0)=0.5).
    return out_padded[:B, :out_dim]


def init_linear(key, fan_in, fan_out):
    # Mimic PyTorch nn.Linear default: U(-1/sqrt(fan_in), 1/sqrt(fan_in)).
    kw, kb = jax.random.split(key)
    bound = 1.0 / jnp.sqrt(jnp.float32(fan_in))
    w = jax.random.uniform(kw, (fan_in, fan_out), jnp.float32, -bound, bound)
    b = jax.random.uniform(kb, (1, fan_out), jnp.float32, -bound, bound)
    return w, b


def reference_forward(x, params):
    (w0, b0), (w1, b1), (w2, b2) = params
    y = jnp.maximum(x @ w0 + b0, 0.0)
    y = jnp.maximum(y @ w1 + b1, 0.0)
    return jax.nn.sigmoid(y @ w2 + b2)


if __name__ == "__main__":
    # BCFModel(in_in=16, in_out=unused, out_out=8, h_ins=[32, 32], h_outs=[32, 32])
    #   in_layer:  Linear(16, 32)
    #   h_layers:  [Linear(32, 32), Dropout]
    #   out_layer: Linear(32, 8)
    in_in, h0, h1, out_out = 16, 32, 32, 8
    batch = 200  # not a tile multiple: exercises batch padding; tile shrinks to 128 -> grid=(2,)

    key = jax.random.PRNGKey(0)
    kx, k0, k1, k2 = jax.random.split(key, 4)

    x = jax.random.normal(kx, (batch, in_in), jnp.float32)
    params = (
        init_linear(k0, in_in, h0),      # in_layer
        init_linear(k1, h0, h1),         # hidden layer
        init_linear(k2, h1, out_out),    # out_layer
    )

    out = bcf_forward(x, params)
    out = jax.block_until_ready(out)

    ref = reference_forward(x, params)
    assert out.shape == (batch, out_out)
    # bf16 matmul operands -> loosen tolerance vs. the pure-f32 reference.
    err = float(jnp.max(jnp.abs(out - ref)))
    assert jnp.allclose(out, ref, atol=2e-2, rtol=2e-2), f"max abs err {err}"

    print("KERNEL_OK")
</pallas_src>

<mosaic_0001>
module attributes {stable_mosaic.version = 11 : i64} {
  func.func @bcf_mlp_kernel(%arg0: i32, %arg1: memref<128x16xbf16, #tpu.memory_space<vmem>>, %arg2: memref<16x128xbf16, #tpu.memory_space<vmem>>, %arg3: memref<1x128xf32, #tpu.memory_space<vmem>>, %arg4: memref<128x128xbf16, #tpu.memory_space<vmem>>, %arg5: memref<1x128xf32, #tpu.memory_space<vmem>>, %arg6: memref<128x128xbf16, #tpu.memory_space<vmem>>, %arg7: memref<1x128xf32, #tpu.memory_space<vmem>>, %arg8: memref<128x128xf32, #tpu.memory_space<vmem>>) attributes {dimension_semantics = [#tpu.dimension_semantics<parallel>], iteration_bounds = array<i64: 2>, scalar_prefetch = 0 : i64, scratch_operands = 0 : i64, tpu.core_type = #tpu.core_type<tc>, window_params = [{transform_indices = @transform_0, window_bounds = array<i64: 128, 16>}, {pipeline_mode = #tpu.pipeline_mode<synchronous>, transform_indices = @transform_1, window_bounds = array<i64: 16, 128>}, {pipeline_mode = #tpu.pipeline_mode<synchronous>, transform_indices = @transform_2, window_bounds = array<i64: 1, 128>}, {pipeline_mode = #tpu.pipeline_mode<synchronous>, transform_indices = @transform_3, window_bounds = array<i64: 128, 128>}, {pipeline_mode = #tpu.pipeline_mode<synchronous>, transform_indices = @transform_4, window_bounds = array<i64: 1, 128>}, {pipeline_mode = #tpu.pipeline_mode<synchronous>, transform_indices = @transform_5, window_bounds = array<i64: 128, 128>}, {pipeline_mode = #tpu.pipeline_mode<synchronous>, transform_indices = @transform_6, window_bounds = array<i64: 1, 128>}, {transform_indices = @transform_7, window_bounds = array<i64: 128, 128>}]} {
    %c0 = arith.constant 0 : index
    %c0_0 = arith.constant 0 : index
    %0 = vector.load %arg1[%c0, %c0_0] : memref<128x16xbf16, #tpu.memory_space<vmem>>, vector<128x16xbf16>
    %c0_1 = arith.constant 0 : index
    %c0_2 = arith.constant 0 : index
    %1 = vector.load %arg2[%c0_1, %c0_2] : memref<16x128xbf16, #tpu.memory_space<vmem>>, vector<16x128xbf16>
    %cst = arith.constant dense<0.000000e+00> : vector<128x128xf32>
    %2 = tpu.matmul %0, %1, %cst {dimension_numbers = #tpu.dot_dimension_numbers<[1], [0], [0], [1], [0, 0, 1, 1], [], []>} : vector<128x16xbf16>, vector<16x128xbf16>, vector<128x128xf32> -> vector<128x128xf32>
    %c0_3 = arith.constant 0 : index
    %c0_4 = arith.constant 0 : index
    %3 = vector.load %arg3[%c0_3, %c0_4] : memref<1x128xf32, #tpu.memory_space<vmem>>, vector<1x128xf32>
    %4 = vector.broadcast %3 : vector<1x128xf32> to vector<128x128xf32>
    %5 = arith.addf %2, %4 : vector<128x128xf32>
    %cst_5 = arith.constant 0.000000e+00 : f32
    %6 = vector.broadcast %cst_5 : f32 to vector<128x128xf32>
    %7 = arith.maximumf %5, %6 : vector<128x128xf32>
    %8 = arith.truncf %7 : vector<128x128xf32> to vector<128x128xbf16>
    %c0_6 = arith.constant 0 : index
    %c0_7 = arith.constant 0 : index
    %9 = vector.load %arg4[%c0_6, %c0_7] : memref<128x128xbf16, #tpu.memory_space<vmem>>, vector<128x128xbf16>
    %cst_8 = arith.constant dense<0.000000e+00> : vector<128x128xf32>
    %10 = tpu.matmul %8, %9, %cst_8 {dimension_numbers = #tpu.dot_dimension_numbers<[1], [0], [0], [1], [0, 0, 1, 1], [], []>} : vector<128x128xbf16>, vector<128x128xbf16>, vector<128x128xf32> -> vector<128x128xf32>
    %c0_9 = arith.constant 0 : index
    %c0_10 = arith.constant 0 : index
    %11 = vector.load %arg5[%c0_9, %c0_10] : memref<1x128xf32, #tpu.memory_space<vmem>>, vector<1x128xf32>
    %12 = vector.broadcast %11 : vector<1x128xf32> to vector<128x128xf32>
    %13 = arith.addf %10, %12 : vector<128x128xf32>
    %cst_11 = arith.constant 0.000000e+00 : f32
    %14 = vector.broadcast %cst_11 : f32 to vector<128x128xf32>
    %15 = arith.maximumf %13, %14 : vector<128x128xf32>
    %16 = arith.truncf %15 : vector<128x128xf32> to vector<128x128xbf16>
    %c0_12 = arith.constant 0 : index
    %c0_13 = arith.constant 0 : index
    %17 = vector.load %arg6[%c0_12, %c0_13] : memref<128x128xbf16, #tpu.memory_space<vmem>>, vector<128x128xbf16>
    %cst_14 = arith.constant dense<0.000000e+00> : vector<128x128xf32>
    %18 = tpu.matmul %16, %17, %cst_14 {dimension_numbers = #tpu.dot_dimension_numbers<[1], [0], [0], [1], [0, 0, 1, 1], [], []>} : vector<128x128xbf16>, vector<128x128xbf16>, vector<128x128xf32> -> vector<128x128xf32>
    %c0_15 = arith.constant 0 : index
    %c0_16 = arith.constant 0 : index
    %19 = vector.load %arg7[%c0_15, %c0_16] : memref<1x128xf32, #tpu.memory_space<vmem>>, vector<1x128xf32>
    %20 = vector.broadcast %19 : vector<1x128xf32> to vector<128x128xf32>
    %21 = arith.addf %18, %20 : vector<128x128xf32>
    %22 = arith.negf %21 : vector<128x128xf32>
    %23 = math.exp %22 : vector<128x128xf32>
    %cst_17 = arith.constant 1.000000e+00 : f32
    %24 = vector.broadcast %cst_17 : f32 to vector<128x128xf32>
    %25 = arith.addf %24, %23 : vector<128x128xf32>
    %26 = arith.divf %24, %25 : vector<128x128xf32>
    %c0_18 = arith.constant 0 : index
    %c0_19 = arith.constant 0 : index
    %27 = vector.load %arg8[%c0_18, %c0_19] : memref<128x128xf32, #tpu.memory_space<vmem>>, vector<128x128xf32>
    tpu.vector_store %arg8[%c0_18, %c0_19], %26 {strides = array<i32>} : memref<128x128xf32, #tpu.memory_space<vmem>>, vector<128x128xf32>,
    return
  }
  func.func @transform_0(%arg0: i32) -> (i32, i32) {
    %c0_i32 = arith.constant 0 : i32
    %c0_i32_0 = arith.constant 0 : i32
    return %arg0, %c0_i32 : i32, i32
  }
  func.func @transform_1(%arg0: i32) -> (i32, i32) {
    %c0_i32 = arith.constant 0 : i32
    %c0_i32_0 = arith.constant 0 : i32
    %c0_i32_1 = arith.constant 0 : i32
    return %c0_i32, %c0_i32_0 : i32, i32
  }
  func.func @transform_2(%arg0: i32) -> (i32, i32) {
    %c0_i32 = arith.constant 0 : i32
    %c0_i32_0 = arith.constant 0 : i32
    %c0_i32_1 = arith.constant 0 : i32
    return %c0_i32, %c0_i32_0 : i32, i32
  }
  func.func @transform_3(%arg0: i32) -> (i32, i32) {
    %c0_i32 = arith.constant 0 : i32
    %c0_i32_0 = arith.constant 0 : i32
    %c0_i32_1 = arith.constant 0 : i32
    return %c0_i32, %c0_i32_0 : i32, i32
  }
  func.func @transform_4(%arg0: i32) -> (i32, i32) {
    %c0_i32 = arith.constant 0 : i32
    %c0_i32_0 = arith.constant 0 : i32
    %c0_i32_1 = arith.constant 0 : i32
    return %c0_i32, %c0_i32_0 : i32, i32
  }
  func.func @transform_5(%arg0: i32) -> (i32, i32) {
    %c0_i32 = arith.constant 0 : i32
    %c0_i32_0 = arith.constant 0 : i32
    %c0_i32_1 = arith.constant 0 : i32
    return %c0_i32, %c0_i32_0 : i32, i32
  }
  func.func @transform_6(%arg0: i32) -> (i32, i32) {
    %c0_i32 = arith.constant 0 : i32
    %c0_i32_0 = arith.constant 0 : i32
    %c0_i32_1 = arith.constant 0 : i32
    return %c0_i32, %c0_i32_0 : i32, i32
  }
  func.func @transform_7(%arg0: i32) -> (i32, i32) {
    %c0_i32 = arith.constant 0 : i32
    %c0_i32_0 = arith.constant 0 : i32
    return %arg0, %c0_i32 : i32, i32
  }
}

</mosaic_0001>

<llo_original>
// kernel: tpu_custom_call.1
$region0: #{tpu_custom_call.1}
  #allocation0 [shape = 'u32[]', space=smem, size = 0x4, offset = 0x4, fixed_abs, tag = 'smem constant byte address 0x4 - core index']
  #allocation1 [shape = 'u32[72,128]{1,0:T(1,128)}', space=vmem, size = 0x9000, scoped, tag = 'internal scratch']
  %s0 = inlined_call_operand.vmem [shape: bf16[256,16], index: 0, kind: input, shape index: {}]
  %s1 = inlined_call_operand.vmem [shape: bf16[16,128], index: 1, kind: input, shape index: {}]
  %s2 = inlined_call_operand.vmem [shape: f32[1,128], index: 2, kind: input, shape index: {}]
  %s3 = inlined_call_operand.vmem [shape: bf16[128,128], index: 3, kind: input, shape index: {}]
  %s4 = inlined_call_operand.vmem [shape: f32[1,128], index: 4, kind: input, shape index: {}]
  %s5 = inlined_call_operand.vmem [shape: bf16[128,128], index: 5, kind: input, shape index: {}]
  %s6 = inlined_call_operand.vmem [shape: f32[1,128], index: 6, kind: input, shape index: {}]
  %s7 = inlined_call_operand.hbm [shape: f32[256,128], index: 7, kind: output, shape index: {}]
  %s8 = sld [smem:[#allocation0]]
  $region61: #{tpu_custom_call.1} parent=0
    _
  %s10 = ssub.s32 1, %s8
  %s11 = scalar_select 0, %s10, %s8
  $region1: #{tpu_custom_call.1} parent=0
    #allocation2 [shape = 'u8[131072]{0}', space=vmem, size = 0x20000, scoped, tag = 'output window, operand 0']
    #allocation3 [shape = 's32[2]{0}', space=sflag, size = 0x8, scoped, tag = 'scoped memory for tpu_custom_call.1']
    %12 = vsyncpa [#allocation3], 0
    %s13 = scalar_lea.sflag [#allocation3], 1
    %14 = vsyncpa %s13, 0
    loop: start=0, step=1, limit=4
    $region2: #{tpu_custom_call.1} parent=1 // loop_pre_header
      _
    $region3: #{tpu_custom_call.1} parent=1 // loop_header
      %s16 = sphi 0, %s20
      %p17 = scmp.ge.s32.totalorder %s16, 4
      %s26 = sphi 0, %s28
      %s29 = sphi 0, %s26
      %s30 = sphi 0, %s29
      %s46 = sphi 0, %s30
      %s50 = sphi 0, %s50
      %s52 = sphi 0, %s50
      %s53 = sphi 0, %s52
      %s67 = sphi 0, %s53
      %s71 = sphi 0, %s71
      %s73 = sphi 0, %s71
      %s74 = sphi 0, %s73
      %s88 = sphi 0, %s74
      %s92 = sphi 0, %s92
      %s94 = sphi 0, %s92
      %s95 = sphi 0, %s94
      %s109 = sphi 0, %s95
      %s113 = sphi 0, %s113
      %s115 = sphi 0, %s113
      %s116 = sphi 0, %s115
      %s130 = sphi 0, %s116
      %s134 = sphi 0, %s134
      %s136 = sphi 0, %s134
      %s137 = sphi 0, %s136
      %s151 = sphi 0, %s137
      %s155 = sphi 0, %s155
      %s157 = sphi 0, %s155
      %s158 = sphi 0, %s157
      %s172 = sphi 0, %s158
      %s178 = sphi 0, %s180
      %s181 = sphi 0, %s178
      %s182 = sphi 0, %s181
      %s198 = sphi 0, %s182
    $region4: #{tpu_custom_call.1} parent=1 // loop_header_branch
      %19 = sbr.rel (%p17) target = $region8
    $region5: #{tpu_custom_call.1} parent=1 // loop_body
      %s21 = ssub.s32 %s16, 1
      %s22 = ssub.s32 %s16, 2
      %s23 = sadd.s32 %s16, 1
      %s24 = ssub.s32 %s16, %s23
      %p25 = scmp.eq.s32.totalorder %s24, 0
      %s27 = sadd.s32 %s26, 1
      %s28 = scalar_select %p25, %s26, %s27
      %p31 = pneg %p25
      %p32 = scmp.eq.s32.totalorder %s16, 1
      %p33 = por %p31, %p32
      %p34 = scmp.ne.s32.totalorder %s26, %s29
      %p35 = scmp.eq.s32.totalorder %s16, 0
      %p36 = por %p34, %p35
      %p37 = scmp.ne.s32.totalorder %s26, %s29
      %p38 = scmp.eq.s32.totalorder %s21, 1
      %p39 = por %p37, %p38
      %p40 = scmp.ne.s32.totalorder %s29, %s30
      %p41 = scmp.eq.s32.totalorder %s21, 0
      %p42 = por %p40, %p41
      %p43 = scmp.ne.s32.totalorder %s29, %s30
      %p44 = scmp.eq.s32.totalorder %s22, 1
      %p45 = por %p43, %p44
      %p47 = scmp.ne.s32.totalorder %s30, %s46
      %p48 = scmp.eq.s32.totalorder %s22, 0
      %p49 = por %p47, %p48
      %s51 = sadd.s32 %s50, 1
      %p54 = scmp.eq.s32.totalorder %s16, 1
      %p55 = scmp.ne.s32.totalorder %s50, %s52
      %p56 = scmp.eq.s32.totalorder %s16, 0
      %p57 = por %p55, %p56
      %p58 = scmp.ne.s32.totalorder %s50, %s52
      %p59 = scmp.eq.s32.totalorder %s21, 1
      %p60 = por %p58, %p59
      %p61 = scmp.ne.s32.totalorder %s52, %s53
      %p62 = scmp.eq.s32.totalorder %s21, 0
      %p63 = por %p61, %p62
      %p64 = scmp.ne.s32.totalorder %s52, %s53
      %p65 = scmp.eq.s32.totalorder %s22, 1
      %p66 = por %p64, %p65
      %p68 = scmp.ne.s32.totalorder %s53, %s67
      %p69 = scmp.eq.s32.totalorder %s22, 0
      %p70 = por %p68, %p69
      %s72 = sadd.s32 %s71, 1
      %p75 = scmp.eq.s32.totalorder %s16, 1
      %p76 = scmp.ne.s32.totalorder %s71, %s73
      %p77 = scmp.eq.s32.totalorder %s16, 0
      %p78 = por %p76, %p77
      %p79 = scmp.ne.s32.totalorder %s71, %s73
      %p80 = scmp.eq.s32.totalorder %s21, 1
      %p81 = por %p79, %p80
      %p82 = scmp.ne.s32.totalorder %s73, %s74
      %p83 = scmp.eq.s32.totalorder %s21, 0
      %p84 = por %p82, %p83
      %p85 = scmp.ne.s32.totalorder %s73, %s74
      %p86 = scmp.eq.s32.totalorder %s22, 1
      %p87 = por %p85, %p86
      %p89 = scmp.ne.s32.totalorder %s74, %s88
      %p90 = scmp.eq.s32.totalorder %s22, 0
      %p91 = por %p89, %p90
      %s93 = sadd.s32 %s92, 1
      %p96 = scmp.eq.s32.totalorder %s16, 1
      %p97 = scmp.ne.s32.totalorder %s92, %s94
      %p98 = scmp.eq.s32.totalorder %s16, 0
      %p99 = por %p97, %p98
      %p100 = scmp.ne.s32.totalorder %s92, %s94
      %p101 = scmp.eq.s32.totalorder %s21, 1
      %p102 = por %p100, %p101
      %p103 = scmp.ne.s32.totalorder %s94, %s95
      %p104 = scmp.eq.s32.totalorder %s21, 0
      %p105 = por %p103, %p104
      %p106 = scmp.ne.s32.totalorder %s94, %s95
      %p107 = scmp.eq.s32.totalorder %s22, 1
      %p108 = por %p106, %p107
      %p110 = scmp.ne.s32.totalorder %s95, %s109
      %p111 = scmp.eq.s32.totalorder %s22, 0
      %p112 = por %p110, %p111
      %s114 = sadd.s32 %s113, 1
      %p117 = scmp.eq.s32.totalorder %s16, 1
      %p118 = scmp.ne.s32.totalorder %s113, %s115
      %p119 = scmp.eq.s32.totalorder %s16, 0
      %p120 = por %p118, %p119
      %p121 = scmp.ne.s32.totalorder %s113, %s115
      %p122 = scmp.eq.s32.totalorder %s21, 1
      %p123 = por %p121, %p122
      %p124 = scmp.ne.s32.totalorder %s115, %s116
      %p125 = scmp.eq.s32.totalorder %s21, 0
      %p126 = por %p124, %p125
      %p127 = scmp.ne.s32.totalorder %s115, %s116
      %p128 = scmp.eq.s32.totalorder %s22, 1
      %p129 = por %p127, %p128
      %p131 = scmp.ne.s32.totalorder %s116, %s130
      %p132 = scmp.eq.s32.totalorder %s22, 0
      %p133 = por %p131, %p132
      %s135 = sadd.s32 %s134, 1
      %p138 = scmp.eq.s32.totalorder %s16, 1
      %p139 = scmp.ne.s32.totalorder %s134, %s136
      %p140 = scmp.eq.s32.totalorder %s16, 0
      %p141 = por %p139, %p140
      %p142 = scmp.ne.s32.totalorder %s134, %s136
      %p143 = scmp.eq.s32.totalorder %s21, 1
      %p144 = por %p142, %p143
      %p145 = scmp.ne.s32.totalorder %s136, %s137
      %p146 = scmp.eq.s32.totalorder %s21, 0
      %p147 = por %p145, %p146
      %p148 = scmp.ne.s32.totalorder %s136, %s137
      %p149 = scmp.eq.s32.totalorder %s22, 1
      %p150 = por %p148, %p149
      %p152 = scmp.ne.s32.totalorder %s137, %s151
      %p153 = scmp.eq.s32.totalorder %s22, 0
      %p154 = por %p152, %p153
      %s156 = sadd.s32 %s155, 1
      %p159 = scmp.eq.s32.totalorder %s16, 1
      %p160 = scmp.ne.s32.totalorder %s155, %s157
      %p161 = scmp.eq.s32.totalorder %s16, 0
      %p162 = por %p160, %p161
      %p163 = scmp.ne.s32.totalorder %s155, %s157
      %p164 = scmp.eq.s32.totalorder %s21, 1
      %p165 = por %p163, %p164
      %p166 = scmp.ne.s32.totalorder %s157, %s158
      %p167 = scmp.eq.s32.totalorder %s21, 0
      %p168 = por %p166, %p167
      %p169 = scmp.ne.s32.totalorder %s157, %s158
      %p170 = scmp.eq.s32.totalorder %s22, 1
      %p171 = por %p169, %p170
      %p173 = scmp.ne.s32.totalorder %s158, %s172
      %p174 = scmp.eq.s32.totalorder %s22, 0
      %p175 = por %p173, %p174
      %s176 = ssub.s32 %s16, %s23
      %p177 = scmp.eq.s32.totalorder %s176, 0
      %s179 = sadd.s32 %s178, 1
      %s180 = scalar_select %p177, %s178, %s179
      %p183 = pneg %p177
      %p184 = scmp.eq.s32.totalorder %s16, 1
      %p185 = por %p183, %p184
      %p186 = scmp.ne.s32.totalorder %s178, %s181
      %p187 = scmp.eq.s32.totalorder %s16, 0
      %p188 = por %p186, %p187
      %p189 = scmp.ne.s32.totalorder %s178, %s181
      %p190 = scmp.eq.s32.totalorder %s21, 1
      %p191 = por %p189, %p190
      %p192 = scmp.ne.s32.totalorder %s181, %s182
      %p193 = scmp.eq.s32.totalorder %s21, 0
      %p194 = por %p192, %p193
      %p195 = scmp.ne.s32.totalorder %s181, %s182
      %p196 = scmp.eq.s32.totalorder %s22, 1
      %p197 = por %p195, %p196
      %p199 = scmp.ne.s32.totalorder %s182, %s198
      %p200 = scmp.eq.s32.totalorder %s22, 0
      %p201 = por %p199, %p200
      %p202 = scmp.le.s32.totalorder 1, %s16
      %p203 = scmp.lt.s32.totalorder %s16, 3
      %p204 = pnand %p202, %p203
      %p205 = pneg %p204
      // Predicated region
      $region9: #{tpu_custom_call.1} parent=5 // pred_check
        _
      $region10: #{tpu_custom_call.1} parent=5 // pred_check_branch
        %207 = sbr.rel (%p204) target = $region12
      $region11: #{tpu_custom_call.1} parent=5 // pred_region
        %s208 = ssub.s32 %s16, 1
        // Predicated region
        $region13: #{tpu_custom_call.1} parent=11 // pred_check
          %p209 = pneg %p63
        $region14: #{tpu_custom_call.1} parent=11 // pred_check_branch
          %211 = sbr.rel (%p209) target = $region16
        $region15: #{tpu_custom_call.1} parent=11 // pred_region
          _
        $region16: #{tpu_custom_call.1} parent=11 // pred_fallthru
          _
        // Predicated region
        $region17: #{tpu_custom_call.1} parent=11 // pred_check
          %p212 = pneg %p84
        $region18: #{tpu_custom_call.1} parent=11 // pred_check_branch
          %214 = sbr.rel (%p212) target = $region20
        $region19: #{tpu_custom_call.1} parent=11 // pred_region
          _
        $region20: #{tpu_custom_call.1} parent=11 // pred_fallthru
          _
        // Predicated region
        $region21: #{tpu_custom_call.1} parent=11 // pred_check
          %p215 = pneg %p105
        $region22: #{tpu_custom_call.1} parent=11 // pred_check_branch
          %217 = sbr.rel (%p215) target = $region24
        $region23: #{tpu_custom_call.1} parent=11 // pred_region
          _
        $region24: #{tpu_custom_call.1} parent=11 // pred_fallthru
          _
        // Predicated region
        $region25: #{tpu_custom_call.1} parent=11 // pred_check
          %p218 = pneg %p126
        $region26: #{tpu_custom_call.1} parent=11 // pred_check_branch
          %220 = sbr.rel (%p218) target = $region28
        $region27: #{tpu_custom_call.1} parent=11 // pred_region
          _
        $region28: #{tpu_custom_call.1} parent=11 // pred_fallthru
          _
        // Predicated region
        $region29: #{tpu_custom_call.1} parent=11 // pred_check
          %p221 = pneg %p147
        $region30: #{tpu_custom_call.1} parent=11 // pred_check_branch
          %223 = sbr.rel (%p221) target = $region32
        $region31: #{tpu_custom_call.1} parent=11 // pred_region
          _
        $region32: #{tpu_custom_call.1} parent=11 // pred_fallthru
          _
        // Predicated region
        $region33: #{tpu_custom_call.1} parent=11 // pred_check
          %p224 = pneg %p168
        $region34: #{tpu_custom_call.1} parent=11 // pred_check_branch
          %226 = sbr.rel (%p224) target = $region36
        $region35: #{tpu_custom_call.1} parent=11 // pred_region
          _
        $region36: #{tpu_custom_call.1} parent=11 // pred_fallthru
          _
      $region12: #{tpu_custom_call.1} parent=5 // pred_fallthru
        _
      %p227 = scmp.lt.s32.totalorder %s16, 2
      // Predicated region
      $region37: #{tpu_custom_call.1} parent=5 // pred_check
        %p228 = pneg %p227
      $region38: #{tpu_custom_call.1} parent=5 // pred_check_branch
        %230 = sbr.rel (%p228) target = $region40
      $region39: #{tpu_custom_call.1} parent=5 // pred_region
        // Predicated region
        $region41: #{tpu_custom_call.1} parent=39 // pred_check
          %p231 = pneg %p36
        $region42: #{tpu_custom_call.1} parent=39 // pred_check_branch
          %233 = sbr.rel (%p231) target = $region44
        $region43: #{tpu_custom_call.1} parent=39 // pred_region
          %s234 = smul.u32 16, %s16
          %p235 = scmp.lt.s32.totalorder %s234, 31
          %s236 = scalar_select %p235, %s234, 31
          %s237 = smul.addr %s236, 4
          %s238 = scalar_lea.vmem %s0, %s237
          %s239 = smul.u32 16, %s16
        $region44: #{tpu_custom_call.1} parent=39 // pred_fallthru
          _
      $region40: #{tpu_custom_call.1} parent=5 // pred_fallthru
        _
      %p240 = scmp.le.s32.totalorder 1, %s16
      %p241 = scmp.lt.s32.totalorder %s16, 3
      %p242 = pnand %p240, %p241
      %p243 = pneg %p242
      // Predicated region
      $region45: #{tpu_custom_call.1} parent=5 // pred_check
        _
      $region46: #{tpu_custom_call.1} parent=5 // pred_check_branch
        %245 = sbr.rel (%p242) target = $region48
      $region47: #{tpu_custom_call.1} parent=5 // pred_region
        %s246 = ssub.s32 %s16, 1
        %s247 = smul.u32 16, %s21
        %p248 = scmp.lt.s32.totalorder %s247, 31
        %s249 = scalar_select %p248, %s247, 31
        %s250 = smul.addr %s249, 4
        %s251 = scalar_lea.vmem %s0, %s250
        %p252 = pneg %p42
        %p253 = pneg %p39
        %p254 = pneg %p63
        %p255 = pneg %p60
        %p256 = pneg %p84
        %p257 = pneg %p81
        %p258 = pneg %p105
        %p259 = pneg %p102
        %p260 = pneg %p126
        %p261 = pneg %p123
        %p262 = pneg %p147
        %p263 = pneg %p144
        %p264 = pneg %p168
        %p265 = pneg %p165
        %p266 = pneg %p194
        %p267 = pneg %p191
        %s268 = sand.u32 %s181, 1
        %s269 = scalar_lea.sflag [#allocation3], %s268
        %s270 = sand.u32 %s181, 1
        %s271 = smul.addr %s270, 128
        %s272 = scalar_lea.vmem [#allocation2], %s271
        %s273 = smul.u32 16, %s21
        %p274 = scmp.lt.s32.totalorder %s273, 31
        %s275 = scalar_select %p274, %s273, 31
        %s276 = smul.addr %s275, 4
        %s277 = scalar_lea.vmem %s0, %s276
        %s278 = smul.u32 16, %s21
        %s279 = smul.u32 16, %s21
        %v281 = vld [vmem:[%s277] sm:$0xf]
        %v282 = vld [vmem:[%s277 + $0x4] sm:$0xf]
        %v283 = vld [vmem:[%s277 + $0x8] sm:$0xf]
        %v284 = vld [vmem:[%s277 + $0xc] sm:$0xf]
        %v285 = vld [vmem:[%s277 + $0x10] sm:$0xf]
        %v286 = vld [vmem:[%s277 + $0x14] sm:$0xf]
        %v287 = vld [vmem:[%s277 + $0x18] sm:$0xf]
        %v288 = vld [vmem:[%s277 + $0x1c] sm:$0xf]
        %v289 = vld [vmem:[%s277 + $0x20] sm:$0xf]
        %v290 = vld [vmem:[%s277 + $0x24] sm:$0xf]
        %v291 = vld [vmem:[%s277 + $0x28] sm:$0xf]
        %v292 = vld [vmem:[%s277 + $0x2c] sm:$0xf]
        %v293 = vld [vmem:[%s277 + $0x30] sm:$0xf]
        %v294 = vld [vmem:[%s277 + $0x34] sm:$0xf]
        %v295 = vld [vmem:[%s277 + $0x38] sm:$0xf]
        %v296 = vld [vmem:[%s277 + $0x3c] sm:$0xf]
        %v297 = vld [vmem:[%s1] sm:$0xf]
        %v298 = vld [vmem:[%s1 + $0x4] sm:$0xf]
        %v299 = vld [vmem:[%s2] sm:$0x1]
        %v301 = vperm.slane %v299, 0
        %v319 = vunpack.c.l.b16 %v281
        %v320 = vunpack.c.l.b16 %v282
        %v321 = vunpack.c.l.b16 %v283
        %v322 = vunpack.c.l.b16 %v284
        %v323 = vunpack.c.l.b16 %v285
        %v324 = vunpack.c.l.b16 %v286
        %v325 = vunpack.c.l.b16 %v287
        %v326 = vunpack.c.l.b16 %v288
        %v327 = vunpack.c.l.b16 %v289
        %v328 = vunpack.c.l.b16 %v290
        %v329 = vunpack.c.l.b16 %v291
        %v330 = vunpack.c.l.b16 %v292
        %v331 = vunpack.c.l.b16 %v293
        %v332 = vunpack.c.l.b16 %v294
        %v333 = vunpack.c.l.b16 %v295
        %v334 = vunpack.c.l.b16 %v296
        %v335 = vpack.c.b16 %v320, %v319
        %v336 = vpack.c.b16 %v322, %v321
        %v337 = vpack.c.b16 %v324, %v323
        %v338 = vpack.c.b16 %v326, %v325
        %v339 = vpack.c.b16 %v328, %v327
        %v340 = vpack.c.b16 %v330, %v329
        %v341 = vpack.c.b16 %v332, %v331
        %v342 = vpack.c.b16 %v334, %v333
        %v345 = vunpack.c.l.b16 %v297
        %v346 = vunpack.c.l.b16 %v298
        %v347 = vpack.c.b16 %v346, %v345
        %vm349 = vcmask 130048
        %v351 = vsel %vm349, %v335, 0
        %v354 = vsel %vm349, %v336, 0
        %v357 = vsel %vm349, %v337, 0
        %v360 = vsel %vm349, %v338, 0
        %v363 = vsel %vm349, %v339, 0
        %v366 = vsel %vm349, %v340, 0
        %v369 = vsel %vm349, %v341, 0
        %v372 = vsel %vm349, %v342, 0
        %374 = vmatpush.bf16.msra.mxu0 0
        %375 = vmatpush.bf16.msra.mxu0 0
        %376 = vmatpush.bf16.msra.mxu0 0
        %377 = vmatpush.bf16.msra.mxu0 0
        %378 = vmatpush.bf16.msra.mxu0 0
        %379 = vmatpush.bf16.msra.mxu0 0
        %380 = vmatpush.bf16.msra.mxu0 0
        %381 = vmatpush.bf16.msra.mxu0 %v347
        %382 = vmatmul.bf16.gmra.mxu0 %v351
        %v383 = vpop.f32.mrf.mxu0
        %v384 = vadd.f32 %v301, %v383
        %v385 = vpop.f32.mrf.mxu0
        %v386 = vadd.f32 %v301, %v385
        %387 = vmatmul.bf16.gmra.mxu0 %v354
        %v388 = vpop.f32.mrf.mxu0
        %v389 = vadd.f32 %v301, %v388
        %v390 = vpop.f32.mrf.mxu0
        %v391 = vadd.f32 %v301, %v390
        %392 = vmatmul.bf16.gmra.mxu0 %v357
        %v393 = vpop.f32.mrf.mxu0
        %v394 = vadd.f32 %v301, %v393
        %v395 = vpop.f32.mrf.mxu0
        %v396 = vadd.f32 %v301, %v395
        %397 = vmatmul.bf16.gmra.mxu0 %v360
        %v398 = vpop.f32.mrf.mxu0
        %v399 = vadd.f32 %v301, %v398
        %v400 = vpop.f32.mrf.mxu0
        %v401 = vadd.f32 %v301, %v400
        %402 = vmatmul.bf16.gmra.mxu0 %v363
        %v403 = vpop.f32.mrf.mxu0
        %v404 = vadd.f32 %v301, %v403
        %v405 = vpop.f32.mrf.mxu0
        %v406 = vadd.f32 %v301, %v405
        %407 = vmatmul.bf16.gmra.mxu0 %v366
        %v408 = vpop.f32.mrf.mxu0
        %v409 = vadd.f32 %v301, %v408
        %v410 = vpop.f32.mrf.mxu0
        %v411 = vadd.f32 %v301, %v410
        %412 = vmatmul.bf16.gmra.mxu0 %v369
        %v413 = vpop.f32.mrf.mxu0
        %v414 = vadd.f32 %v301, %v413
        %v415 = vpop.f32.mrf.mxu0
        %v416 = vadd.f32 %v301, %v415
        %417 = vmatmul.bf16.gmra.mxu0 %v372
        %v418 = vpop.f32.mrf.mxu0
        %v419 = vadd.f32 %v301, %v418
        %v420 = vpop.f32.mrf.mxu0
        %v421 = vadd.f32 %v301, %v420
        %422 = vdwg.mxu0
        %v423 = vmax.f32 %v384, 0.0
        %v424 = vmax.f32 %v386, 0.0
        %v425 = vmax.f32 %v389, 0.0
        %v426 = vmax.f32 %v391, 0.0
        %v427 = vmax.f32 %v394, 0.0
        %v428 = vmax.f32 %v396, 0.0
        %v429 = vmax.f32 %v399, 0.0
        %v430 = vmax.f32 %v401, 0.0
        %v431 = vmax.f32 %v404, 0.0
        %v432 = vmax.f32 %v406, 0.0
        %v433 = vmax.f32 %v409, 0.0
        %v434 = vmax.f32 %v411, 0.0
        %v435 = vmax.f32 %v414, 0.0
        %v436 = vmax.f32 %v416, 0.0
        %v437 = vmax.f32 %v419, 0.0
        %v438 = vmax.f32 %v421, 0.0
        %v439 = vpack.c.bf16 %v424, %v423
        %v440 = vpack.c.bf16 %v426, %v425
        %v441 = vpack.c.bf16 %v428, %v427
        %v442 = vpack.c.bf16 %v430, %v429
        %v443 = vpack.c.bf16 %v432, %v431
        %v444 = vpack.c.bf16 %v434, %v433
        %v445 = vpack.c.bf16 %v436, %v435
        %v446 = vpack.c.bf16 %v438, %v437
        %v447 = vld [vmem:[%s3] sm:$0xf]
        %v448 = vld [vmem:[%s3 + $0x4] sm:$0xf]
        %v449 = vld [vmem:[%s3 + $0x8] sm:$0xf]
        %v450 = vld [vmem:[%s3 + $0xc] sm:$0xf]
        %v451 = vld [vmem:[%s3 + $0x10] sm:$0xf]
        %v452 = vld [vmem:[%s3 + $0x14] sm:$0xf]
        %v453 = vld [vmem:[%s3 + $0x18] sm:$0xf]
        %v454 = vld [vmem:[%s3 + $0x1c] sm:$0xf]
        %v455 = vld [vmem:[%s3 + $0x20] sm:$0xf]
        %v456 = vld [vmem:[%s3 + $0x24] sm:$0xf]
        %v457 = vld [vmem:[%s3 + $0x28] sm:$0xf]
        %v458 = vld [vmem:[%s3 + $0x2c] sm:$0xf]
        %v459 = vld [vmem:[%s3 + $0x30] sm:$0xf]
        %v460 = vld [vmem:[%s3 + $0x34] sm:$0xf]
        %v461 = vld [vmem:[%s3 + $0x38] sm:$0xf]
        %v462 = vld [vmem:[%s3 + $0x3c] sm:$0xf]
        %v463 = vld [vmem:[%s4] sm:$0x1]
        %v465 = vperm.slane %v463, 0
        %v483 = vunpack.c.l.b16 %v447
        %v484 = vunpack.c.l.b16 %v448
        %v485 = vunpack.c.l.b16 %v449
        %v486 = vunpack.c.l.b16 %v450
        %v487 = vunpack.c.l.b16 %v451
        %v488 = vunpack.c.l.b16 %v452
        %v489 = vunpack.c.l.b16 %v453
        %v490 = vunpack.c.l.b16 %v454
        %v491 = vunpack.c.l.b16 %v455
        %v492 = vunpack.c.l.b16 %v456
        %v493 = vunpack.c.l.b16 %v457
        %v494 = vunpack.c.l.b16 %v458
        %v495 = vunpack.c.l.b16 %v459
        %v496 = vunpack.c.l.b16 %v460
        %v497 = vunpack.c.l.b16 %v461
        %v498 = vunpack.c.l.b16 %v462
        %v499 = vpack.c.b16 %v484, %v483
        %v500 = vpack.c.b16 %v486, %v485
        %v501 = vpack.c.b16 %v488, %v487
        %v502 = vpack.c.b16 %v490, %v489
        %v503 = vpack.c.b16 %v492, %v491
        %v504 = vpack.c.b16 %v494, %v493
        %v505 = vpack.c.b16 %v496, %v495
        %v506 = vpack.c.b16 %v498, %v497
        %515 = vmatpush.bf16.msra.mxu0 %v506
        %516 = vmatpush.bf16.msra.mxu0 %v505
        %517 = vmatpush.bf16.msra.mxu0 %v504
        %518 = vmatpush.bf16.msra.mxu0 %v503
        %519 = vmatpush.bf16.msra.mxu0 %v502
        %520 = vmatpush.bf16.msra.mxu0 %v501
        %521 = vmatpush.bf16.msra.mxu0 %v500
        %522 = vmatpush.bf16.msra.mxu0 %v499
        %523 = vmatmul.bf16.gmra.mxu0 %v439
        %v524 = vpop.f32.mrf.mxu0
        %v525 = vadd.f32 %v465, %v524
        %v526 = vpop.f32.mrf.mxu0
        %v527 = vadd.f32 %v465, %v526
        %528 = vmatmul.bf16.gmra.mxu0 %v440
        %v529 = vpop.f32.mrf.mxu0
        %v530 = vadd.f32 %v465, %v529
        %v531 = vpop.f32.mrf.mxu0
        %v532 = vadd.f32 %v465, %v531
        %533 = vmatmul.bf16.gmra.mxu0 %v441
        %v534 = vpop.f32.mrf.mxu0
        %v535 = vadd.f32 %v465, %v534
        %v536 = vpop.f32.mrf.mxu0
        %v537 = vadd.f32 %v465, %v536
        %538 = vmatmul.bf16.gmra.mxu0 %v442
        %v539 = vpop.f32.mrf.mxu0
        %v540 = vadd.f32 %v465, %v539
        %v541 = vpop.f32.mrf.mxu0
        %v542 = vadd.f32 %v465, %v541
        %543 = vmatmul.bf16.gmra.mxu0 %v443
        %v544 = vpop.f32.mrf.mxu0
        %v545 = vadd.f32 %v465, %v544
        %v546 = vpop.f32.mrf.mxu0
        %v547 = vadd.f32 %v465, %v546
        %548 = vmatmul.bf16.gmra.mxu0 %v444
        %v549 = vpop.f32.mrf.mxu0
        %v550 = vadd.f32 %v465, %v549
        %v551 = vpop.f32.mrf.mxu0
        %v552 = vadd.f32 %v465, %v551
        %553 = vmatmul.bf16.gmra.mxu0 %v445
        %v554 = vpop.f32.mrf.mxu0
        %v555 = vadd.f32 %v465, %v554
        %v556 = vpop.f32.mrf.mxu0
        %v557 = vadd.f32 %v465, %v556
        %558 = vmatmul.bf16.gmra.mxu0 %v446
        %v559 = vpop.f32.mrf.mxu0
        %v560 = vadd.f32 %v465, %v559
        %v561 = vpop.f32.mrf.mxu0
        %v562 = vadd.f32 %v465, %v561
        %563 = vdwg.mxu0
        %v564 = vmax.f32 %v525, 0.0
        %v565 = vmax.f32 %v527, 0.0
        %v566 = vmax.f32 %v530, 0.0
        %v567 = vmax.f32 %v532, 0.0
        %v568 = vmax.f32 %v535, 0.0
        %v569 = vmax.f32 %v537, 0.0
        %v570 = vmax.f32 %v540, 0.0
        %v571 = vmax.f32 %v542, 0.0
        %v572 = vmax.f32 %v545, 0.0
        %v573 = vmax.f32 %v547, 0.0
        %v574 = vmax.f32 %v550, 0.0
        %v575 = vmax.f32 %v552, 0.0
        %v576 = vmax.f32 %v555, 0.0
        %v577 = vmax.f32 %v557, 0.0
        %v578 = vmax.f32 %v560, 0.0
        %v579 = vmax.f32 %v562, 0.0
        %v580 = vpack.c.bf16 %v565, %v564
        %v581 = vpack.c.bf16 %v567, %v566
        %v582 = vpack.c.bf16 %v569, %v568
        %v583 = vpack.c.bf16 %v571, %v570
        %v584 = vpack.c.bf16 %v573, %v572
        %v585 = vpack.c.bf16 %v575, %v574
        %v586 = vpack.c.bf16 %v577, %v576
        %v587 = vpack.c.bf16 %v579, %v578
        %v588 = vld [vmem:[%s5] sm:$0xf]
        %v589 = vld [vmem:[%s5 + $0x4] sm:$0xf]
        %v590 = vld [vmem:[%s5 + $0x8] sm:$0xf]
        %v591 = vld [vmem:[%s5 + $0xc] sm:$0xf]
        %v592 = vld [vmem:[%s5 + $0x10] sm:$0xf]
        %v593 = vld [vmem:[%s5 + $0x14] sm:$0xf]
        %v594 = vld [vmem:[%s5 + $0x18] sm:$0xf]
        %v595 = vld [vmem:[%s5 + $0x1c] sm:$0xf]
        %v596 = vld [vmem:[%s5 + $0x20] sm:$0xf]
        %v597 = vld [vmem:[%s5 + $0x24] sm:$0xf]
        %v598 = vld [vmem:[%s5 + $0x28] sm:$0xf]
        %v599 = vld [vmem:[%s5 + $0x2c] sm:$0xf]
        %v600 = vld [vmem:[%s5 + $0x30] sm:$0xf]
        %v601 = vld [vmem:[%s5 + $0x34] sm:$0xf]
        %v602 = vld [vmem:[%s5 + $0x38] sm:$0xf]
        %v603 = vld [vmem:[%s5 + $0x3c] sm:$0xf]
        %v604 = vld [vmem:[%s6] sm:$0x1]
        %v606 = vperm.slane %v604, 0
        %v624 = vunpack.c.l.b16 %v588
        %v625 = vunpack.c.l.b16 %v589
        %v626 = vunpack.c.l.b16 %v590
        %v627 = vunpack.c.l.b16 %v591
        %v628 = vunpack.c.l.b16 %v592
        %v629 = vunpack.c.l.b16 %v593
        %v630 = vunpack.c.l.b16 %v594
        %v631 = vunpack.c.l.b16 %v595
        %v632 = vunpack.c.l.b16 %v596
        %v633 = vunpack.c.l.b16 %v597
        %v634 = vunpack.c.l.b16 %v598
        %v635 = vunpack.c.l.b16 %v599
        %v636 = vunpack.c.l.b16 %v600
        %v637 = vunpack.c.l.b16 %v601
        %v638 = vunpack.c.l.b16 %v602
        %v639 = vunpack.c.l.b16 %v603
        %v640 = vpack.c.b16 %v625, %v624
        %v641 = vpack.c.b16 %v627, %v626
        %v642 = vpack.c.b16 %v629, %v628
        %v643 = vpack.c.b16 %v631, %v630
        %v644 = vpack.c.b16 %v633, %v632
        %v645 = vpack.c.b16 %v635, %v634
        %v646 = vpack.c.b16 %v637, %v636
        %v647 = vpack.c.b16 %v639, %v638
        %656 = vmatpush.bf16.msra.mxu0 %v647
        %657 = vmatpush.bf16.msra.mxu0 %v646
        %658 = vmatpush.bf16.msra.mxu0 %v645
        %659 = vmatpush.bf16.msra.mxu0 %v644
        %660 = vmatpush.bf16.msra.mxu0 %v643
        %661 = vmatpush.bf16.msra.mxu0 %v642
        %662 = vmatpush.bf16.msra.mxu0 %v641
        %663 = vmatpush.bf16.msra.mxu0 %v640
        %664 = vmatmul.bf16.gmra.mxu0 %v580
        %v665 = vpop.f32.mrf.mxu0
        %v666 = vadd.f32 %v606, %v665
        %v667 = vpop.f32.mrf.mxu0
        %v668 = vadd.f32 %v606, %v667
        %669 = vmatmul.bf16.gmra.mxu0 %v581
        %v670 = vpop.f32.mrf.mxu0
        %v671 = vadd.f32 %v606, %v670
        %v672 = vpop.f32.mrf.mxu0
        %v673 = vadd.f32 %v606, %v672
        %674 = vmatmul.bf16.gmra.mxu0 %v582
        %v675 = vpop.f32.mrf.mxu0
        %v676 = vadd.f32 %v606, %v675
        %v677 = vpop.f32.mrf.mxu0
        %v678 = vadd.f32 %v606, %v677
        %679 = vmatmul.bf16.gmra.mxu0 %v583
        %v680 = vpop.f32.mrf.mxu0
        %v681 = vadd.f32 %v606, %v680
        %v682 = vpop.f32.mrf.mxu0
        %v683 = vadd.f32 %v606, %v682
        %684 = vmatmul.bf16.gmra.mxu0 %v584
        %v685 = vpop.f32.mrf.mxu0
        %v686 = vadd.f32 %v606, %v685
        %v687 = vpop.f32.mrf.mxu0
        %v688 = vadd.f32 %v606, %v687
        %689 = vmatmul.bf16.gmra.mxu0 %v585
        %v690 = vpop.f32.mrf.mxu0
        %v691 = vadd.f32 %v606, %v690
        %v692 = vpop.f32.mrf.mxu0
        %v693 = vadd.f32 %v606, %v692
        %694 = vmatmul.bf16.gmra.mxu0 %v586
        %v695 = vpop.f32.mrf.mxu0
        %v696 = vadd.f32 %v606, %v695
        %v697 = vpop.f32.mrf.mxu0
        %v698 = vadd.f32 %v606, %v697
        %699 = vmatmul.bf16.gmra.mxu0 %v587
        %v700 = vpop.f32.mrf.mxu0
        %v701 = vadd.f32 %v606, %v700
        %v702 = vpop.f32.mrf.mxu0
        %v703 = vadd.f32 %v606, %v702
        %704 = vdwg.mxu0
        %v705 = vxor.u32 %v666, 2147483648
        %v706 = vxor.u32 %v668, 2147483648
        %v707 = vxor.u32 %v671, 2147483648
        %v708 = vxor.u32 %v673, 2147483648
        %v709 = vxor.u32 %v676, 2147483648
        %v710 = vxor.u32 %v678, 2147483648
        %v711 = vxor.u32 %v681, 2147483648
        %v712 = vxor.u32 %v683, 2147483648
        %v713 = vxor.u32 %v686, 2147483648
        %v714 = vxor.u32 %v688, 2147483648
        %v715 = vxor.u32 %v691, 2147483648
        %v716 = vxor.u32 %v693, 2147483648
        %v717 = vxor.u32 %v696, 2147483648
        %v718 = vxor.u32 %v698, 2147483648
        %v719 = vxor.u32 %v701, 2147483648
        %v720 = vxor.u32 %v703, 2147483648
        %v721 = vmul.f32 %v705, 1.442695
        %v722 = vpow.pop %v721
        %v723 = vmul.f32 %v706, 1.442695
        %v724 = vpow.pop %v723
        %v725 = vmul.f32 %v707, 1.442695
        %v726 = vpow.pop %v725
        %v727 = vmul.f32 %v708, 1.442695
        %v728 = vpow.pop %v727
        %v729 = vmul.f32 %v709, 1.442695
        %v730 = vpow.pop %v729
        %v731 = vmul.f32 %v710, 1.442695
        %v732 = vpow.pop %v731
        %v733 = vmul.f32 %v711, 1.442695
        %v734 = vpow.pop %v733
        %v735 = vmul.f32 %v712, 1.442695
        %v736 = vpow.pop %v735
        %v737 = vmul.f32 %v713, 1.442695
        %v738 = vpow.pop %v737
        %v739 = vmul.f32 %v714, 1.442695
        %v740 = vpow.pop %v739
        %v741 = vmul.f32 %v715, 1.442695
        %v742 = vpow.pop %v741
        %v743 = vmul.f32 %v716, 1.442695
        %v744 = vpow.pop %v743
        %v745 = vmul.f32 %v717, 1.442695
        %v746 = vpow.pop %v745
        %v747 = vmul.f32 %v718, 1.442695
        %v748 = vpow.pop %v747
        %v749 = vmul.f32 %v719, 1.442695
        %v750 = vpow.pop %v749
        %v751 = vmul.f32 %v720, 1.442695
        %v752 = vpow.pop %v751
        %v753 = vadd.f32 %v722, 1.0
        %v754 = vadd.f32 %v724, 1.0
        %v755 = vadd.f32 %v726, 1.0
        %v756 = vadd.f32 %v728, 1.0
        %v757 = vadd.f32 %v730, 1.0
        %v758 = vadd.f32 %v732, 1.0
        %v759 = vadd.f32 %v734, 1.0
        %v760 = vadd.f32 %v736, 1.0
        %v761 = vadd.f32 %v738, 1.0
        %v762 = vadd.f32 %v740, 1.0
        %v763 = vadd.f32 %v742, 1.0
        %v764 = vadd.f32 %v744, 1.0
        %v765 = vadd.f32 %v746, 1.0
        %v766 = vadd.f32 %v748, 1.0
        %v767 = vadd.f32 %v750, 1.0
        %v768 = vadd.f32 %v752, 1.0
        %v769 = vrcp.pop %v753
        %v770 = vmul.f32 %v753, %v769
        %v771 = vsub.f32 1.0, %v770
        %v772 = vmul.f32 %v769, %v771
        %v773 = vadd.f32 %v769, %v772
        %vm774 = vweird.f32 %v753
        %vm775 = vweird.f32 %v769
        %vm776 = vmor %vm774, %vm775
        %v777 = vsel %vm776, %v769, %v773
        %v778 = vand.u32 2147483647, %v753
        %vm779 = vcmp.eq.f32.partialorder %v778, 8.507059e+37
        %v780 = vand.u32 %v753, 2147483648
        %v781 = vor.u32 1.1754944e-38, %v780
        %v782 = vsel %vm779, %v781, %v777
        %v783 = vmul.f32 1.0, %v782
        %v784 = vrcp.pop %v754
        %v785 = vmul.f32 %v754, %v784
        %v786 = vsub.f32 1.0, %v785
        %v787 = vmul.f32 %v784, %v786
        %v788 = vadd.f32 %v784, %v787
        %vm789 = vweird.f32 %v754
        %vm790 = vweird.f32 %v784
        %vm791 = vmor %vm789, %vm790
        %v792 = vsel %vm791, %v784, %v788
        %v793 = vand.u32 2147483647, %v754
        %vm794 = vcmp.eq.f32.partialorder %v793, 8.507059e+37
        %v795 = vand.u32 %v754, 2147483648
        %v796 = vor.u32 1.1754944e-38, %v795
        %v797 = vsel %vm794, %v796, %v792
        %v798 = vmul.f32 1.0, %v797
        %v799 = vrcp.pop %v755
        %v800 = vmul.f32 %v755, %v799
        %v801 = vsub.f32 1.0, %v800
        %v802 = vmul.f32 %v799, %v801
        %v803 = vadd.f32 %v799, %v802
        %vm804 = vweird.f32 %v755
        %vm805 = vweird.f32 %v799
        %vm806 = vmor %vm804, %vm805
        %v807 = vsel %vm806, %v799, %v803
        %v808 = vand.u32 2147483647, %v755
        %vm809 = vcmp.eq.f32.partialorder %v808, 8.507059e+37
        %v810 = vand.u32 %v755, 2147483648
        %v811 = vor.u32 1.1754944e-38, %v810
        %v812 = vsel %vm809, %v811, %v807
        %v813 = vmul.f32 1.0, %v812
        %v814 = vrcp.pop %v756
        %v815 = vmul.f32 %v756, %v814
        %v816 = vsub.f32 1.0, %v815
        %v817 = vmul.f32 %v814, %v816
        %v818 = vadd.f32 %v814, %v817
        %vm819 = vweird.f32 %v756
        %vm820 = vweird.f32 %v814
        %vm821 = vmor %vm819, %vm820
        %v822 = vsel %vm821, %v814, %v818
        %v823 = vand.u32 2147483647, %v756
        %vm824 = vcmp.eq.f32.partialorder %v823, 8.507059e+37
        %v825 = vand.u32 %v756, 2147483648
        %v826 = vor.u32 1.1754944e-38, %v825
        %v827 = vsel %vm824, %v826, %v822
        %v828 = vmul.f32 1.0, %v827
        %v829 = vrcp.pop %v757
        %v830 = vmul.f32 %v757, %v829
        %v831 = vsub.f32 1.0, %v830
        %v832 = vmul.f32 %v829, %v831
        %v833 = vadd.f32 %v829, %v832
        %vm834 = vweird.f32 %v757
        %vm835 = vweird.f32 %v829
        %vm836 = vmor %vm834, %vm835
        %v837 = vsel %vm836, %v829, %v833
        %v838 = vand.u32 2147483647, %v757
        %vm839 = vcmp.eq.f32.partialorder %v838, 8.507059e+37
        %v840 = vand.u32 %v757, 2147483648
        %v841 = vor.u32 1.1754944e-38, %v840
        %v842 = vsel %vm839, %v841, %v837
        %v843 = vmul.f32 1.0, %v842
        %v844 = vrcp.pop %v758
        %v845 = vmul.f32 %v758, %v844
        %v846 = vsub.f32 1.0, %v845
        %v847 = vmul.f32 %v844, %v846
        %v848 = vadd.f32 %v844, %v847
        %vm849 = vweird.f32 %v758
        %vm850 = vweird.f32 %v844
        %vm851 = vmor %vm849, %vm850
        %v852 = vsel %vm851, %v844, %v848
        %v853 = vand.u32 2147483647, %v758
        %vm854 = vcmp.eq.f32.partialorder %v853, 8.507059e+37
        %v855 = vand.u32 %v758, 2147483648
        %v856 = vor.u32 1.1754944e-38, %v855
        %v857 = vsel %vm854, %v856, %v852
        %v858 = vmul.f32 1.0, %v857
        %v859 = vrcp.pop %v759
        %v860 = vmul.f32 %v759, %v859
        %v861 = vsub.f32 1.0, %v860
        %v862 = vmul.f32 %v859, %v861
        %v863 = vadd.f32 %v859, %v862
        %vm864 = vweird.f32 %v759
        %vm865 = vweird.f32 %v859
        %vm866 = vmor %vm864, %vm865
        %v867 = vsel %vm866, %v859, %v863
        %v868 = vand.u32 2147483647, %v759
        %vm869 = vcmp.eq.f32.partialorder %v868, 8.507059e+37
        %v870 = vand.u32 %v759, 2147483648
        %v871 = vor.u32 1.1754944e-38, %v870
        %v872 = vsel %vm869, %v871, %v867
        %v873 = vmul.f32 1.0, %v872
        %v874 = vrcp.pop %v760
        %v875 = vmul.f32 %v760, %v874
        %v876 = vsub.f32 1.0, %v875
        %v877 = vmul.f32 %v874, %v876
        %v878 = vadd.f32 %v874, %v877
        %vm879 = vweird.f32 %v760
        %vm880 = vweird.f32 %v874
        %vm881 = vmor %vm879, %vm880
        %v882 = vsel %vm881, %v874, %v878
        %v883 = vand.u32 2147483647, %v760
        %vm884 = vcmp.eq.f32.partialorder %v883, 8.507059e+37
        %v885 = vand.u32 %v760, 2147483648
        %v886 = vor.u32 1.1754944e-38, %v885
        %v887 = vsel %vm884, %v886, %v882
        %v888 = vmul.f32 1.0, %v887
        %v889 = vrcp.pop %v761
        %v890 = vmul.f32 %v761, %v889
        %v891 = vsub.f32 1.0, %v890
        %v892 = vmul.f32 %v889, %v891
        %v893 = vadd.f32 %v889, %v892
        %vm894 = vweird.f32 %v761
        %vm895 = vweird.f32 %v889
        %vm896 = vmor %vm894, %vm895
        %v897 = vsel %vm896, %v889, %v893
        %v898 = vand.u32 2147483647, %v761
        %vm899 = vcmp.eq.f32.partialorder %v898, 8.507059e+37
        %v900 = vand.u32 %v761, 2147483648
        %v901 = vor.u32 1.1754944e-38, %v900
        %v902 = vsel %vm899, %v901, %v897
        %v903 = vmul.f32 1.0, %v902
        %v904 = vrcp.pop %v762
        %v905 = vmul.f32 %v762, %v904
        %v906 = vsub.f32 1.0, %v905
        %v907 = vmul.f32 %v904, %v906
        %v908 = vadd.f32 %v904, %v907
        %vm909 = vweird.f32 %v762
        %vm910 = vweird.f32 %v904
        %vm911 = vmor %vm909, %vm910
        %v912 = vsel %vm911, %v904, %v908
        %v913 = vand.u32 2147483647, %v762
        %vm914 = vcmp.eq.f32.partialorder %v913, 8.507059e+37
        %v915 = vand.u32 %v762, 2147483648
        %v916 = vor.u32 1.1754944e-38, %v915
        %v917 = vsel %vm914, %v916, %v912
        %v918 = vmul.f32 1.0, %v917
        %v919 = vrcp.pop %v763
        %v920 = vmul.f32 %v763, %v919
        %v921 = vsub.f32 1.0, %v920
        %v922 = vmul.f32 %v919, %v921
        %v923 = vadd.f32 %v919, %v922
        %vm924 = vweird.f32 %v763
        %vm925 = vweird.f32 %v919
        %vm926 = vmor %vm924, %vm925
        %v927 = vsel %vm926, %v919, %v923
        %v928 = vand.u32 2147483647, %v763
        %vm929 = vcmp.eq.f32.partialorder %v928, 8.507059e+37
        %v930 = vand.u32 %v763, 2147483648
        %v931 = vor.u32 1.1754944e-38, %v930
        %v932 = vsel %vm929, %v931, %v927
        %v933 = vmul.f32 1.0, %v932
        %v934 = vrcp.pop %v764
        %v935 = vmul.f32 %v764, %v934
        %v936 = vsub.f32 1.0, %v935
        %v937 = vmul.f32 %v934, %v936
        %v938 = vadd.f32 %v934, %v937
        %vm939 = vweird.f32 %v764
        %vm940 = vweird.f32 %v934
        %vm941 = vmor %vm939, %vm940
        %v942 = vsel %vm941, %v934, %v938
        %v943 = vand.u32 2147483647, %v764
        %vm944 = vcmp.eq.f32.partialorder %v943, 8.507059e+37
        %v945 = vand.u32 %v764, 2147483648
        %v946 = vor.u32 1.1754944e-38, %v945
        %v947 = vsel %vm944, %v946, %v942
        %v948 = vmul.f32 1.0, %v947
        %v949 = vrcp.pop %v765
        %v950 = vmul.f32 %v765, %v949
        %v951 = vsub.f32 1.0, %v950
        %v952 = vmul.f32 %v949, %v951
        %v953 = vadd.f32 %v949, %v952
        %vm954 = vweird.f32 %v765
        %vm955 = vweird.f32 %v949
        %vm956 = vmor %vm954, %vm955
        %v957 = vsel %vm956, %v949, %v953
        %v958 = vand.u32 2147483647, %v765
        %vm959 = vcmp.eq.f32.partialorder %v958, 8.507059e+37
        %v960 = vand.u32 %v765, 2147483648
        %v961 = vor.u32 1.1754944e-38, %v960
        %v962 = vsel %vm959, %v961, %v957
        %v963 = vmul.f32 1.0, %v962
        %v964 = vrcp.pop %v766
        %v965 = vmul.f32 %v766, %v964
        %v966 = vsub.f32 1.0, %v965
        %v967 = vmul.f32 %v964, %v966
        %v968 = vadd.f32 %v964, %v967
        %vm969 = vweird.f32 %v766
        %vm970 = vweird.f32 %v964
        %vm971 = vmor %vm969, %vm970
        %v972 = vsel %vm971, %v964, %v968
        %v973 = vand.u32 2147483647, %v766
        %vm974 = vcmp.eq.f32.partialorder %v973, 8.507059e+37
        %v975 = vand.u32 %v766, 2147483648
        %v976 = vor.u32 1.1754944e-38, %v975
        %v977 = vsel %vm974, %v976, %v972
        %v978 = vmul.f32 1.0, %v977
        %v979 = vrcp.pop %v767
        %v980 = vmul.f32 %v767, %v979
        %v981 = vsub.f32 1.0, %v980
        %v982 = vmul.f32 %v979, %v981
        %v983 = vadd.f32 %v979, %v982
        %vm984 = vweird.f32 %v767
        %vm985 = vweird.f32 %v979
        %vm986 = vmor %vm984, %vm985
        %v987 = vsel %vm986, %v979, %v983
        %v988 = vand.u32 2147483647, %v767
        %vm989 = vcmp.eq.f32.partialorder %v988, 8.507059e+37
        %v990 = vand.u32 %v767, 2147483648
        %v991 = vor.u32 1.1754944e-38, %v990
        %v992 = vsel %vm989, %v991, %v987
        %v993 = vmul.f32 1.0, %v992
        %v994 = vrcp.pop %v768
        %v995 = vmul.f32 %v768, %v994
        %v996 = vsub.f32 1.0, %v995
        %v997 = vmul.f32 %v994, %v996
        %v998 = vadd.f32 %v994, %v997
        %vm999 = vweird.f32 %v768
        %vm1000 = vweird.f32 %v994
        %vm1001 = vmor %vm999, %vm1000
        %v1002 = vsel %vm1001, %v994, %v998
        %v1003 = vand.u32 2147483647, %v768
        %vm1004 = vcmp.eq.f32.partialorder %v1003, 8.507059e+37
        %v1005 = vand.u32 %v768, 2147483648
        %v1006 = vor.u32 1.1754944e-38, %v1005
        %v1007 = vsel %vm1004, %v1006, %v1002
        %v1008 = vmul.f32 1.0, %v1007
        %1009 = vst [vmem:[%s272] sm:$0xff] %v783
        %1010 = vst [vmem:[%s272 + $0x8] sm:$0xff] %v798
        %1011 = vst [vmem:[%s272 + $0x10] sm:$0xff] %v813
        %1012 = vst [vmem:[%s272 + $0x18] sm:$0xff] %v828
        %1013 = vst [vmem:[%s272 + $0x20] sm:$0xff] %v843
        %1014 = vst [vmem:[%s272 + $0x28] sm:$0xff] %v858
        %1015 = vst [vmem:[%s272 + $0x30] sm:$0xff] %v873
        %1016 = vst [vmem:[%s272 + $0x38] sm:$0xff] %v888
        %1017 = vst [vmem:[%s272 + $0x40] sm:$0xff] %v903
        %1018 = vst [vmem:[%s272 + $0x48] sm:$0xff] %v918
        %1019 = vst [vmem:[%s272 + $0x50] sm:$0xff] %v933
        %1020 = vst [vmem:[%s272 + $0x58] sm:$0xff] %v948
        %1021 = vst [vmem:[%s272 + $0x60] sm:$0xff] %v963
        %1022 = vst [vmem:[%s272 + $0x68] sm:$0xff] %v978
        %1023 = vst [vmem:[%s272 + $0x70] sm:$0xff] %v993
        %1024 = vst [vmem:[%s272 + $0x78] sm:$0xff] %v1008
        %s1025 = sand.u32 %s181, 1
        %s1026 = scalar_lea.sflag [#allocation3], %s1025
        %s1027 = sand.u32 %s181, 1
        %s1028 = smul.addr %s1027, 128
        %s1029 = scalar_lea.vmem [#allocation2], %s1028
        // Predicated region
        $region49: #{tpu_custom_call.1} parent=47 // pred_check
          %p1030 = pneg %p191
        $region50: #{tpu_custom_call.1} parent=47 // pred_check_branch
          %1032 = sbr.rel (%p1030) target = $region52
        $region51: #{tpu_custom_call.1} parent=47 // pred_region
          %s1033 = smul.u32 16, %s21
          %1035 = vsyncadd %s1026, 0
          %s1036 = smul.addr %s1033, 8
          %s1037 = scalar_lea.hbm %s7, %s1036
          %s1038 = sshll.u32 %s1029, 4
          %s1039 = int_to_ptr.vmem [resolvable:$true] %s1038
          %s1040 = sshll.u32 %s1037, 4
          %s1041 = int_to_ptr.hbm [resolvable:$true] %s1040
          %1046 = dma.vmem_to_hbm [thread:$0]  %s1039, 2048, %s1041, %s1026, 128, 128, 8
        $region52: #{tpu_custom_call.1} parent=47 // pred_fallthru
          _
      $region48: #{tpu_custom_call.1} parent=5 // pred_fallthru
        _
      %p1047 = scmp.le.s32.totalorder 2, %s16
      // Predicated region
      $region53: #{tpu_custom_call.1} parent=5 // pred_check
        %p1048 = pneg %p1047
      $region54: #{tpu_custom_call.1} parent=5 // pred_check_branch
        %1050 = sbr.rel (%p1048) target = $region56
      $region55: #{tpu_custom_call.1} parent=5 // pred_region
        %s1051 = ssub.s32 %s16, 2
        // Predicated region
        $region57: #{tpu_custom_call.1} parent=55 // pred_check
          %p1052 = pneg %p197
        $region58: #{tpu_custom_call.1} parent=55 // pred_check_branch
          %1054 = sbr.rel (%p1052) target = $region60
        $region59: #{tpu_custom_call.1} parent=55 // pred_region
          %s1055 = sand.u32 %s182, 1
          %s1056 = scalar_lea.sflag [#allocation3], %s1055
          %s1057 = sand.u32 %s182, 1
          %s1058 = smul.addr %s1057, 128
          %s1059 = scalar_lea.vmem [#allocation2], %s1058
          %1061 = dma.done %s1056, 2048
        $region60: #{tpu_custom_call.1} parent=55 // pred_fallthru
          _
      $region56: #{tpu_custom_call.1} parent=5 // pred_fallthru
        _
    $region6: #{tpu_custom_call.1} parent=1 // loop_footer
      %s20 = sadd.s32 1, %s16
    $region7: #{tpu_custom_call.1} parent=1 // loop_footer_branch
      %15 = sbr.rel target = $region3
    $region8: #{tpu_custom_call.1} parent=1 // loop_exit
      _
    %1062 = vsyncpa [#allocation3], 1
    %s1063 = scalar_lea.sflag [#allocation3], 1
    %1064 = vsyncpa %s1063, 1

</llo_original>
